<compile_context>
chip_gen: v6e
topology: v6e:2x2x1
jax: 0.10.0
libtpu: 0.0.40
codegen_flags: <defaults>
</compile_context>

<pallas_src>
import functools

import jax
import jax.numpy as jnp
from jax.experimental import pallas as pl
from jax.experimental.pallas import tpu as pltpu

_SQRT_2_OVER_PI = 0.7978845608028654
_GELU_C = 0.044715


def _round_up(n, m):
    return ((n + m - 1) // m) * m


def _multi_core_chip():
    """Best-effort: True only on chips with >1 TensorCore (e.g. v7x)."""
    try:
        info = pltpu.get_tpu_info()
        for attr in ("num_cores", "tensorcore_count", "core_count",
                     "num_tensorcores"):
            v = getattr(info, attr, None)
            if isinstance(v, int) and v > 0:
                return v > 1
    except Exception:
        pass
    try:
        kind = jax.devices()[0].device_kind.lower()
        return ("v7" in kind) or ("7x" in kind)
    except Exception:
        return False


def _dynmoe_kernel(x_ref, wgt_ref, g_ref, sel_ref, w1_ref, b1_ref, w2_ref,
                   b2_ref, o_ref, *, num_experts):
    x = x_ref[...]                                            # (TN, D) native

    # ---- gating (f32, bit-faithful to the reference) ------------------------
    xf = x.astype(jnp.float32)
    sumsq = jnp.sum(xf * xf, axis=-1, keepdims=True)
    x_norm = xf * jax.lax.rsqrt(jnp.maximum(sumsq, 1e-24))    # F.normalize
    sims = jnp.dot(x_norm, wgt_ref[...],
                   preferred_element_type=jnp.float32)        # (TN, E)
    scores = 1.0 / (1.0 + jnp.exp(-sims))                     # sigmoid (EUP exp)
    gates = (scores > g_ref[...]).astype(jnp.float32)         # (TN, E)
    k = jnp.sum(gates, axis=-1, keepdims=True)                # (TN, 1)

    # first-occurrence argmax over experts (torch.argmax tie-break)
    e_idx = jax.lax.broadcasted_iota(jnp.int32, scores.shape, 1)
    max_s = jnp.max(scores, axis=-1, keepdims=True)
    top1_idx = jnp.min(jnp.where(scores == max_s, e_idx, num_experts),
                       axis=-1, keepdims=True)                # (TN, 1)
    top1_onehot = (e_idx == top1_idx).astype(jnp.float32)     # (TN, E)

    # per-(token, expert) combine weight; exact divide on the tiny column
    inv_k = 1.0 / (k + 1e-12)
    w_gate = jnp.where(k > 0.0, gates * inv_k, top1_onehot)   # (TN, E) f32

    # ---- experts: two wide fused matmuls over the stacked E*H axis ----------
    h = jnp.dot(x.astype(w1_ref.dtype), w1_ref[...],
                preferred_element_type=jnp.float32)           # (TN, E*H) f32
    h = h + b1_ref[...]
    # tanh-approx GELU: the transcendental goes to the EUP slot instead of a
    # long erf polynomial on the VPU (the previously binding VALU slot).
    inner = _SQRT_2_OVER_PI * (h + _GELU_C * (h * h * h))
    h = 0.5 * h * (1.0 + jnp.tanh(inner))

    if num_experts == 1:
        hw = (h * w_gate).astype(w2_ref.dtype)                # (TN, H) bf16
        bias = w_gate * b2_ref[...].astype(jnp.float32)       # (TN, DP) f32
    else:
        # expand (TN, E) gate weights to (TN, E*H): tiny bf16 selector matmul
        w_gate_b = w_gate.astype(sel_ref.dtype)
        w_exp = jnp.dot(w_gate_b, sel_ref[...],
                        preferred_element_type=jnp.float32)   # (TN, E*H)
        hw = (h * w_exp).astype(w2_ref.dtype)                 # bf16 for GEMM2
        bias = jnp.dot(w_gate_b, b2_ref[...],
                       preferred_element_type=jnp.float32)    # sum_e w_e * b2_e

    # GEMM2 output is DP(=128*)-wide (zero-padded W2/b2) -> unmasked vst.
    out = jnp.dot(hw, w2_ref[...],
                  preferred_element_type=jnp.float32) + bias  # (TN, DP)
    o_ref[...] = out.astype(o_ref.dtype)


def dynmoe_forward(x, wg_active, g_active, w1_active, b1_active, w2_active,
                   b2_active, *, max_tokens_per_tile=1024,
                   mxu_dtype=jnp.bfloat16):
    """x: (B, S, D).  Active-expert slices stacked on axis 0:
       wg (E, D), g (E,), w1 (E, D, H), b1 (E, H), w2 (E, H, D), b2 (E, D)."""
    B, S, D = x.shape
    E, _, H = w1_active.shape
    EH = E * H
    N = B * S
    x_flat = x.reshape(N, D)                      # keep native dtype for DMA

    # Token tiling: large tiles amortize the ~0.35us per-grid-step overhead.
    # Only add an extra split on multi-TensorCore chips (v7x) and only when
    # each tile keeps >= 128 rows; single-TC chips (v5e/v6e) never force-split.
    num_tiles = pl.cdiv(N, max_tokens_per_tile)
    if num_tiles == 1 and N >= 256 and _multi_core_chip():
        num_tiles = 2
    TN = _round_up(pl.cdiv(N, num_tiles), 8)
    N_pad = TN * num_tiles
    if N_pad != N:
        x_flat = jnp.pad(x_flat, ((0, N_pad - N), (0, 0)))

    # Lane-dense output width (stores become unmasked full-lane vst).
    DP = _round_up(max(D, 128), 128)

    # Grid-invariant gating prep, hoisted out of the kernel (f32, exact).
    wg = wg_active.astype(jnp.float32)
    wg_norm_t = (wg / jnp.maximum(
        jnp.linalg.norm(wg, axis=-1, keepdims=True), 1e-12)).T        # (D, E)
    g_sig = jax.nn.sigmoid(g_active.astype(jnp.float32)).reshape(1, E)

    # Expert weights fused on a stacked E*H axis (bf16 MXU operands).
    w1_all = jnp.transpose(w1_active.astype(jnp.float32), (1, 0, 2)
                           ).reshape(D, EH).astype(mxu_dtype)          # (D, E*H)
    b1_all = b1_active.astype(jnp.float32).reshape(1, EH)
    w2_all = jnp.pad(w2_active.astype(jnp.float32).reshape(EH, D),
                     ((0, 0), (0, DP - D))).astype(mxu_dtype)          # (E*H, DP)
    b2_all = jnp.pad(b2_active.astype(jnp.float32),
                     ((0, 0), (0, DP - D))).astype(mxu_dtype)          # (E, DP)
    sel = jnp.repeat(jnp.eye(E, dtype=jnp.float32), H, axis=1
                     ).astype(mxu_dtype)                               # (E, E*H)

    kernel = functools.partial(_dynmoe_kernel, num_experts=E)
    out_flat = pl.pallas_call(
        kernel,
        out_shape=jax.ShapeDtypeStruct((N_pad, DP), x.dtype),
        grid_spec=pltpu.PrefetchScalarGridSpec(
            num_scalar_prefetch=0,
            grid=(num_tiles,),
            in_specs=[
                pl.BlockSpec((TN, D), lambda i: (i, 0)),          # x tile
                pl.BlockSpec((D, E), lambda i: (0, 0)),           # l2norm(Wg)^T
                pl.BlockSpec((1, E), lambda i: (0, 0)),           # sigmoid(G)
                pl.BlockSpec((E, EH), lambda i: (0, 0)),          # gate->E*H sel
                pl.BlockSpec((D, EH), lambda i: (0, 0)),          # fused W1
                pl.BlockSpec((1, EH), lambda i: (0, 0)),          # fused b1
                pl.BlockSpec((EH, DP), lambda i: (0, 0)),         # fused W2 (pad)
                pl.BlockSpec((E, DP), lambda i: (0, 0)),          # b2 (pad)
            ],
            out_specs=pl.BlockSpec((TN, DP), lambda i: (i, 0)),
        ),
        compiler_params=pltpu.CompilerParams(
            dimension_semantics=("parallel",),
            vmem_limit_bytes=48 * 1024 * 1024),
    )(x_flat, wg_norm_t, g_sig, sel, w1_all, b1_all, w2_all, b2_all)

    return out_flat[:N, :D].reshape(B, S, D)


def _reference_forward(x, wg_a, g_a, w1, b1, w2, b2):
    """Pure-JAX f32 mirror of DYNMOELayer.forward (eval mode, exact-erf GELU)."""
    B, S, D = x.shape
    E = wg_a.shape[0]
    xf = x.reshape(-1, D).astype(jnp.float32)
    xn = xf / jnp.maximum(jnp.linalg.norm(xf, axis=-1, keepdims=True), 1e-12)
    wgn = wg_a / jnp.maximum(jnp.linalg.norm(wg_a, axis=-1, keepdims=True), 1e-12)
    scores = jax.nn.sigmoid(xn @ wgn.T)
    gates = (scores > jax.nn.sigmoid(g_a)[None, :]).astype(jnp.float32)
    ys = []
    for e in range(E):
        h = xf @ w1[e] + b1[e]
        h = 0.5 * h * (1.0 + jax.lax.erf(h / jnp.sqrt(2.0)))
        ys.append(h @ w2[e] + b2[e])
    ys = jnp.stack(ys, axis=1)                               # (N, E, D)
    combined = jnp.sum(ys * gates[..., None], axis=1)
    k = gates.sum(axis=-1)
    scale = jnp.where(k > 0, 1.0 / (k + 1e-12), 1.0)[:, None]
    out = combined * scale
    top1 = jnp.argmax(scores, axis=-1)
    top1_gate = jax.nn.one_hot(top1, E, dtype=jnp.float32)
    top1_out = jnp.sum(ys * top1_gate[..., None], axis=1)
    out = jnp.where((k == 0)[:, None], top1_out, out)
    return out.reshape(B, S, D)


if __name__ == "__main__":
    # Module hyperparameters (small, consistent with the reference forward).
    input_dim, expert_dim, max_experts = 32, 64, 16
    batch, seq = 2, 8

    key = jax.random.PRNGKey(0)
    k_wg, k_x, k_exp, k_b1, k_b2 = jax.random.split(key, 5)

    # Weight init mirroring reset_parameters() (orthogonal gate, 0.02-std
    # linears). Biases get small nonzero values (instead of zeros) purely to
    # exercise the fused bias paths.
    Wg = jax.nn.initializers.orthogonal()(k_wg, (max_experts, input_dim), jnp.float32)
    G = jnp.zeros((max_experts,), jnp.float32)
    ek = jax.random.split(k_exp, max_experts * 2)
    W1 = jnp.stack([0.02 * jax.random.normal(ek[2 * e], (input_dim, expert_dim), jnp.float32)
                    for e in range(max_experts)])
    B1 = 0.02 * jax.random.normal(k_b1, (max_experts, expert_dim), jnp.float32)
    W2 = jnp.stack([0.02 * jax.random.normal(ek[2 * e + 1], (expert_dim, input_dim), jnp.float32)
                    for e in range(max_experts)])
    B2 = 0.02 * jax.random.normal(k_b2, (max_experts, input_dim), jnp.float32)

    x = jax.random.normal(k_x, (batch, seq, input_dim), jnp.float32)

    # Case 1: default module state (only expert 0 active).
    # Case 2: several active experts (as after adapt_experts()), exercising
    #         multi-expert gating, 1/k combine and the top-1 fallback.
    for active in [(0,), (0, 1, 2, 3)]:
        idx = jnp.asarray(active, jnp.int32)
        args = (Wg[idx], G[idx], W1[idx], B1[idx], W2[idx], B2[idx])
        out = jax.block_until_ready(dynmoe_forward(x, *args))
        ref = _reference_forward(x, *args)
        assert out.shape == (batch, seq, input_dim)
        # tolerance covers bf16 MXU operands/intermediates + tanh-approx GELU
        assert jnp.allclose(out, ref, atol=1.5e-3, rtol=2e-2), \
            f"mismatch vs JAX reference for active={active}"

    # TODO(synk): training-only RE/RS buffer updates, adapt_experts() and
    # auxiliary_loss() are host-side state/loss bookkeeping, not part of the
    # eval forward kernel.
    print("KERNEL_OK")
</pallas_src>

<mosaic_0001>
module attributes {stable_mosaic.version = 11 : i64} {
  func.func @_dynmoe_kernel(%arg0: i32, %arg1: memref<16x32xf32, #tpu.memory_space<vmem>>, %arg2: memref<32x1xf32, #tpu.memory_space<vmem>>, %arg3: memref<1x1xf32, #tpu.memory_space<vmem>>, %arg4: memref<1x64xbf16, #tpu.memory_space<vmem>>, %arg5: memref<32x64xbf16, #tpu.memory_space<vmem>>, %arg6: memref<1x64xf32, #tpu.memory_space<vmem>>, %arg7: memref<64x128xbf16, #tpu.memory_space<vmem>>, %arg8: memref<1x128xbf16, #tpu.memory_space<vmem>>, %arg9: memref<16x128xf32, #tpu.memory_space<vmem>>) attributes {dimension_semantics = [#tpu.dimension_semantics<parallel>], iteration_bounds = array<i64: 1>, scalar_prefetch = 0 : i64, scratch_operands = 0 : i64, tpu.core_type = #tpu.core_type<tc>, window_params = [{transform_indices = @transform_0, window_bounds = array<i64: 16, 32>}, {pipeline_mode = #tpu.pipeline_mode<synchronous>, transform_indices = @transform_1, window_bounds = array<i64: 32, 1>}, {pipeline_mode = #tpu.pipeline_mode<synchronous>, transform_indices = @transform_2, window_bounds = array<i64: 1, 1>}, {pipeline_mode = #tpu.pipeline_mode<synchronous>, transform_indices = @transform_3, window_bounds = array<i64: 1, 64>}, {pipeline_mode = #tpu.pipeline_mode<synchronous>, transform_indices = @transform_4, window_bounds = array<i64: 32, 64>}, {pipeline_mode = #tpu.pipeline_mode<synchronous>, transform_indices = @transform_5, window_bounds = array<i64: 1, 64>}, {pipeline_mode = #tpu.pipeline_mode<synchronous>, transform_indices = @transform_6, window_bounds = array<i64: 64, 128>}, {pipeline_mode = #tpu.pipeline_mode<synchronous>, transform_indices = @transform_7, window_bounds = array<i64: 1, 128>}, {transform_indices = @transform_8, window_bounds = array<i64: 16, 128>}]} {
    %c0 = arith.constant 0 : index
    %c0_0 = arith.constant 0 : index
    %0 = vector.load %arg1[%c0, %c0_0] : memref<16x32xf32, #tpu.memory_space<vmem>>, vector<16x32xf32>
    %1 = arith.mulf %0, %0 : vector<16x32xf32>
    %cst = arith.constant dense<0.000000e+00> : vector<16xf32>
    %2 = vector.multi_reduction <add>, %1, %cst [1] : vector<16x32xf32> to vector<16xf32>
    %3 = vector.shape_cast %2 : vector<16xf32> to vector<16x1xf32>
    %cst_1 = arith.constant 1.000000e-24 : f32
    %4 = vector.broadcast %cst_1 : f32 to vector<16x1xf32>
    %5 = arith.maximumf %3, %4 : vector<16x1xf32>
    %6 = math.rsqrt %5 : vector<16x1xf32>
    %7 = vector.broadcast %6 : vector<16x1xf32> to vector<16x32xf32>
    %8 = arith.mulf %0, %7 : vector<16x32xf32>
    %c0_2 = arith.constant 0 : index
    %c0_3 = arith.constant 0 : index
    %9 = vector.load %arg2[%c0_2, %c0_3] : memref<32x1xf32, #tpu.memory_space<vmem>>, vector<32x1xf32>
    %cst_4 = arith.constant dense<0.000000e+00> : vector<16x1xf32>
    %10 = tpu.matmul %8, %9, %cst_4 {dimension_numbers = #tpu.dot_dimension_numbers<[1], [0], [0], [1], [0, 0, 1, 1], [], []>} : vector<16x32xf32>, vector<32x1xf32>, vector<16x1xf32> -> vector<16x1xf32>
    %cst_5 = arith.constant 0.000000e+00 : f32
    %11 = vector.broadcast %cst_5 : f32 to vector<16x1xf32>
    %12 = arith.subf %11, %10 : vector<16x1xf32>
    %13 = math.exp %12 : vector<16x1xf32>
    %cst_6 = arith.constant 1.000000e+00 : f32
    %14 = vector.broadcast %cst_6 : f32 to vector<16x1xf32>
    %15 = arith.addf %14, %13 : vector<16x1xf32>
    %cst_7 = arith.constant 1.000000e+00 : f32
    %16 = vector.broadcast %cst_7 : f32 to vector<16x1xf32>
    %17 = arith.divf %16, %15 : vector<16x1xf32>
    %c0_8 = arith.constant 0 : index
    %c0_9 = arith.constant 0 : index
    %18 = vector.load %arg3[%c0_8, %c0_9] : memref<1x1xf32, #tpu.memory_space<vmem>>, vector<1x1xf32>
    %19 = vector.broadcast %18 : vector<1x1xf32> to vector<16x1xf32>
    %20 = arith.cmpf ogt, %17, %19 : vector<16x1xf32>
    %21 = arith.extui %20 : vector<16x1xi1> to vector<16x1xi32>
    %22 = arith.sitofp %21 : vector<16x1xi32> to vector<16x1xf32>
    %cst_10 = arith.constant dense<0.000000e+00> : vector<16xf32>
    %23 = vector.multi_reduction <add>, %22, %cst_10 [1] : vector<16x1xf32> to vector<16xf32>
    %24 = vector.shape_cast %23 : vector<16xf32> to vector<16x1xf32>
    %25 = tpu.iota {dimensions = array<i32: 1>} : vector<16x1xi32>
    %cst_11 = arith.constant dense<0xFF800000> : vector<16xf32>
    %26 = vector.multi_reduction <maximumf>, %17, %cst_11 [1] : vector<16x1xf32> to vector<16xf32>
    %27 = vector.shape_cast %26 : vector<16xf32> to vector<16x1xf32>
    %28 = arith.cmpf oeq, %17, %27 : vector<16x1xf32>
    %c1_i32 = arith.constant 1 : i32
    %29 = vector.broadcast %c1_i32 : i32 to vector<16x1xi32>
    %30 = arith.select %28, %25, %29 : vector<16x1xi1>, vector<16x1xi32>
    %cst_12 = arith.constant dense<2147483647> : vector<16xi32>
    %31 = vector.multi_reduction <minsi>, %30, %cst_12 [1] : vector<16x1xi32> to vector<16xi32>
    %32 = vector.shape_cast %31 : vector<16xi32> to vector<16x1xi32>
    %33 = arith.cmpi eq, %25, %32 : vector<16x1xi32>
    %34 = arith.extui %33 : vector<16x1xi1> to vector<16x1xi32>
    %35 = arith.sitofp %34 : vector<16x1xi32> to vector<16x1xf32>
    %cst_13 = arith.constant 9.99999996E-13 : f32
    %36 = vector.broadcast %cst_13 : f32 to vector<16x1xf32>
    %37 = arith.addf %24, %36 : vector<16x1xf32>
    %cst_14 = arith.constant 1.000000e+00 : f32
    %38 = vector.broadcast %cst_14 : f32 to vector<16x1xf32>
    %39 = arith.divf %38, %37 : vector<16x1xf32>
    %cst_15 = arith.constant 0.000000e+00 : f32
    %40 = vector.broadcast %cst_15 : f32 to vector<16x1xf32>
    %41 = arith.cmpf ogt, %24, %40 : vector<16x1xf32>
    %42 = arith.mulf %22, %39 : vector<16x1xf32>
    %43 = arith.select %41, %42, %35 : vector<16x1xi1>, vector<16x1xf32>
    %44 = arith.truncf %0 : vector<16x32xf32> to vector<16x32xbf16>
    %c0_16 = arith.constant 0 : index
    %c0_17 = arith.constant 0 : index
    %45 = vector.load %arg5[%c0_16, %c0_17] : memref<32x64xbf16, #tpu.memory_space<vmem>>, vector<32x64xbf16>
    %cst_18 = arith.constant dense<0.000000e+00> : vector<16x64xf32>
    %46 = tpu.matmul %44, %45, %cst_18 {dimension_numbers = #tpu.dot_dimension_numbers<[1], [0], [0], [1], [0, 0, 1, 1], [], []>} : vector<16x32xbf16>, vector<32x64xbf16>, vector<16x64xf32> -> vector<16x64xf32>
    %c0_19 = arith.constant 0 : index
    %c0_20 = arith.constant 0 : index
    %47 = vector.load %arg6[%c0_19, %c0_20] : memref<1x64xf32, #tpu.memory_space<vmem>>, vector<1x64xf32>
    %48 = vector.broadcast %47 : vector<1x64xf32> to vector<16x64xf32>
    %49 = arith.addf %46, %48 : vector<16x64xf32>
    %50 = arith.mulf %49, %49 : vector<16x64xf32>
    %51 = arith.mulf %50, %49 : vector<16x64xf32>
    %cst_21 = arith.constant 4.471500e-02 : f32
    %52 = vector.broadcast %cst_21 : f32 to vector<16x64xf32>
    %53 = arith.mulf %52, %51 : vector<16x64xf32>
    %54 = arith.addf %49, %53 : vector<16x64xf32>
    %cst_22 = arith.constant 0.797884583 : f32
    %55 = vector.broadcast %cst_22 : f32 to vector<16x64xf32>
    %56 = arith.mulf %55, %54 : vector<16x64xf32>
    %cst_23 = arith.constant 5.000000e-01 : f32
    %57 = vector.broadcast %cst_23 : f32 to vector<16x64xf32>
    %58 = arith.mulf %57, %49 : vector<16x64xf32>
    %59 = math.tanh %56 : vector<16x64xf32>
    %cst_24 = arith.constant 1.000000e+00 : f32
    %60 = vector.broadcast %cst_24 : f32 to vector<16x64xf32>
    %61 = arith.addf %60, %59 : vector<16x64xf32>
    %62 = arith.mulf %58, %61 : vector<16x64xf32>
    %63 = vector.broadcast %43 : vector<16x1xf32> to vector<16x64xf32>
    %64 = arith.mulf %62, %63 : vector<16x64xf32>
    %65 = arith.truncf %64 : vector<16x64xf32> to vector<16x64xbf16>
    %c0_25 = arith.constant 0 : index
    %c0_26 = arith.constant 0 : index
    %66 = vector.load %arg8[%c0_25, %c0_26] : memref<1x128xbf16, #tpu.memory_space<vmem>>, vector<1x128xbf16>
    %67 = arith.extf %66 : vector<1x128xbf16> to vector<1x128xf32>
    %68 = vector.broadcast %43 : vector<16x1xf32> to vector<16x128xf32>
    %69 = vector.broadcast %67 : vector<1x128xf32> to vector<16x128xf32>
    %70 = arith.mulf %68, %69 : vector<16x128xf32>
    %c0_27 = arith.constant 0 : index
    %c0_28 = arith.constant 0 : index
    %71 = vector.load %arg7[%c0_27, %c0_28] : memref<64x128xbf16, #tpu.memory_space<vmem>>, vector<64x128xbf16>
    %cst_29 = arith.constant dense<0.000000e+00> : vector<16x128xf32>
    %72 = tpu.matmul %65, %71, %cst_29 {dimension_numbers = #tpu.dot_dimension_numbers<[1], [0], [0], [1], [0, 0, 1, 1], [], []>} : vector<16x64xbf16>, vector<64x128xbf16>, vector<16x128xf32> -> vector<16x128xf32>
    %73 = arith.addf %72, %70 : vector<16x128xf32>
    %c0_30 = arith.constant 0 : index
    %c0_31 = arith.constant 0 : index
    %74 = vector.load %arg9[%c0_30, %c0_31] : memref<16x128xf32, #tpu.memory_space<vmem>>, vector<16x128xf32>
    tpu.vector_store %arg9[%c0_30, %c0_31], %73 {strides = array<i32>} : memref<16x128xf32, #tpu.memory_space<vmem>>, vector<16x128xf32>,
    return
  }
  func.func @transform_0(%arg0: i32) -> (i32, i32) {
    %c0_i32 = arith.constant 0 : i32
    %c0_i32_0 = arith.constant 0 : i32
    return %arg0, %c0_i32 : i32, i32
  }
  func.func @transform_1(%arg0: i32) -> (i32, i32) {
    %c0_i32 = arith.constant 0 : i32
    %c0_i32_0 = arith.constant 0 : i32
    %c0_i32_1 = arith.constant 0 : i32
    return %c0_i32, %c0_i32_0 : i32, i32
  }
  func.func @transform_2(%arg0: i32) -> (i32, i32) {
    %c0_i32 = arith.constant 0 : i32
    %c0_i32_0 = arith.constant 0 : i32
    %c0_i32_1 = arith.constant 0 : i32
    return %c0_i32, %c0_i32_0 : i32, i32
  }
  func.func @transform_3(%arg0: i32) -> (i32, i32) {
    %c0_i32 = arith.constant 0 : i32
    %c0_i32_0 = arith.constant 0 : i32
    %c0_i32_1 = arith.constant 0 : i32
    return %c0_i32, %c0_i32_0 : i32, i32
  }
  func.func @transform_4(%arg0: i32) -> (i32, i32) {
    %c0_i32 = arith.constant 0 : i32
    %c0_i32_0 = arith.constant 0 : i32
    %c0_i32_1 = arith.constant 0 : i32
    return %c0_i32, %c0_i32_0 : i32, i32
  }
  func.func @transform_5(%arg0: i32) -> (i32, i32) {
    %c0_i32 = arith.constant 0 : i32
    %c0_i32_0 = arith.constant 0 : i32
    %c0_i32_1 = arith.constant 0 : i32
    return %c0_i32, %c0_i32_0 : i32, i32
  }
  func.func @transform_6(%arg0: i32) -> (i32, i32) {
    %c0_i32 = arith.constant 0 : i32
    %c0_i32_0 = arith.constant 0 : i32
    %c0_i32_1 = arith.constant 0 : i32
    return %c0_i32, %c0_i32_0 : i32, i32
  }
  func.func @transform_7(%arg0: i32) -> (i32, i32) {
    %c0_i32 = arith.constant 0 : i32
    %c0_i32_0 = arith.constant 0 : i32
    %c0_i32_1 = arith.constant 0 : i32
    return %c0_i32, %c0_i32_0 : i32, i32
  }
  func.func @transform_8(%arg0: i32) -> (i32, i32) {
    %c0_i32 = arith.constant 0 : i32
    %c0_i32_0 = arith.constant 0 : i32
    return %arg0, %c0_i32 : i32, i32
  }
}

</mosaic_0001>

<llo_original>
// kernel: tpu_custom_call.1
$region0: #{tpu_custom_call.1}
  #allocation0 [shape = 'u32[]', space=smem, size = 0x4, offset = 0x4, fixed_abs, tag = 'smem constant byte address 0x4 - core index']
  #allocation1 [shape = 'u32[144,128]{1,0:T(1,128)}', space=vmem, size = 0x12000, scoped, tag = 'internal scratch']
  #allocation2 [shape = 'f32[1,1]{1,0:T(1,128)S(1)}', space=vmem, size = 0x200, scoped, tag = 'scoped memory for tpu_custom_call.1']
  %s0 = inlined_call_operand.hbm [shape: f32[16,32], index: 0, kind: input, shape index: {}]
  %s1 = inlined_call_operand.vmem [shape: f32[32,1], index: 1, kind: input, shape index: {}]
  %s2 = inlined_call_operand.<no memory space> [shape: f32[1,1], index: 2, kind: input, shape index: {}]
  %s3 = inlined_call_operand.vmem [shape: bf16[1,64], index: 3, kind: input, shape index: {}]
  %s4 = inlined_call_operand.hbm [shape: bf16[32,64], index: 4, kind: input, shape index: {}]
  %s5 = inlined_call_operand.vmem [shape: f32[1,64], index: 5, kind: input, shape index: {}]
  %s6 = inlined_call_operand.vmem [shape: bf16[64,128], index: 6, kind: input, shape index: {}]
  %s7 = inlined_call_operand.vmem [shape: bf16[1,128], index: 7, kind: input, shape index: {}]
  %s8 = inlined_call_operand.hbm [shape: f32[16,128], index: 8, kind: output, shape index: {}]
  %s9 = sld [smem:[#allocation0]]
  $region50: #{tpu_custom_call.1} parent=0
    _
  %s11 = ssub.s32 1, %s9
  %s12 = scalar_select 0, %s11, %s9
  %v13 = vstv %s2
  %14 = vst [vmem:[#allocation2] sm:$0x1] %v13
  $region1: #{tpu_custom_call.1} parent=0
    #allocation3 [shape = 'u8[8192]{0}', space=vmem, size = 0x2000, scoped, tag = 'input window, operand 0, single buffered']
    #allocation4 [shape = 's32[1]{0}', space=sflag, size = 0x4, scoped, tag = 'scoped memory for tpu_custom_call.1']
    #allocation5 [shape = 's32[1]{0}', space=sflag, size = 0x4, scoped, tag = 'scoped memory for tpu_custom_call.1']
    #allocation6 [shape = 'u8[8192]{0}', space=vmem, size = 0x2000, scoped, tag = 'input window, operand 4, single buffered']
    #allocation7 [shape = 's32[1]{0}', space=sflag, size = 0x4, scoped, tag = 'scoped memory for tpu_custom_call.1']
    #allocation8 [shape = 'u8[8192]{0}', space=vmem, size = 0x2000, scoped, tag = 'output window, operand 0, single buffered']
    %15 = vsyncpa [#allocation4], 0
    %16 = vsyncpa [#allocation7], 0
    %17 = vsyncpa [#allocation5], 0
    // Predicated region
    $region2: #{tpu_custom_call.1} parent=1 // pred_check
      _
    $region3: #{tpu_custom_call.1} parent=1 // pred_check_branch
      %19 = sbr.rel (0) target = $region5
    $region4: #{tpu_custom_call.1} parent=1 // pred_region
      %s21 = ssub.s32 256, 256
      %22 = vsyncadd [#allocation4], %s21
      %s23 = sshll.u32 [#allocation3], 4
      %s24 = int_to_ptr.vmem [resolvable:$true] %s23
      %29 = dma.hbm_to_vmem [thread:$0]  %s0, 256, %s24, [#allocation4], 128, 128, 8
    $region5: #{tpu_custom_call.1} parent=1 // pred_fallthru
      _
    // Predicated region
    $region6: #{tpu_custom_call.1} parent=1 // pred_check
      _
    $region7: #{tpu_custom_call.1} parent=1 // pred_check_branch
      %31 = sbr.rel (0) target = $region9
    $region8: #{tpu_custom_call.1} parent=1 // pred_region
      _
    $region9: #{tpu_custom_call.1} parent=1 // pred_fallthru
      _
    // Predicated region
    $region10: #{tpu_custom_call.1} parent=1 // pred_check
      _
    $region11: #{tpu_custom_call.1} parent=1 // pred_check_branch
      %33 = sbr.rel (0) target = $region13
    $region12: #{tpu_custom_call.1} parent=1 // pred_region
      _
    $region13: #{tpu_custom_call.1} parent=1 // pred_fallthru
      _
    // Predicated region
    $region14: #{tpu_custom_call.1} parent=1 // pred_check
      _
    $region15: #{tpu_custom_call.1} parent=1 // pred_check_branch
      %35 = sbr.rel (0) target = $region17
    $region16: #{tpu_custom_call.1} parent=1 // pred_region
      _
    $region17: #{tpu_custom_call.1} parent=1 // pred_fallthru
      _
    // Predicated region
    $region18: #{tpu_custom_call.1} parent=1 // pred_check
      _
    $region19: #{tpu_custom_call.1} parent=1 // pred_check_branch
      %37 = sbr.rel (0) target = $region21
    $region20: #{tpu_custom_call.1} parent=1 // pred_region
      %s39 = ssub.s32 256, 256
      %40 = vsyncadd [#allocation7], %s39
      %s41 = sshll.u32 [#allocation6], 4
      %s42 = int_to_ptr.vmem [resolvable:$true] %s41
      %47 = dma.hbm_to_vmem [thread:$0]  %s4, 256, %s42, [#allocation7], 64, 64, 4
    $region21: #{tpu_custom_call.1} parent=1 // pred_fallthru
      _
    // Predicated region
    $region22: #{tpu_custom_call.1} parent=1 // pred_check
      _
    $region23: #{tpu_custom_call.1} parent=1 // pred_check_branch
      %49 = sbr.rel (0) target = $region25
    $region24: #{tpu_custom_call.1} parent=1 // pred_region
      _
    $region25: #{tpu_custom_call.1} parent=1 // pred_fallthru
      _
    // Predicated region
    $region26: #{tpu_custom_call.1} parent=1 // pred_check
      _
    $region27: #{tpu_custom_call.1} parent=1 // pred_check_branch
      %51 = sbr.rel (0) target = $region29
    $region28: #{tpu_custom_call.1} parent=1 // pred_region
      _
    $region29: #{tpu_custom_call.1} parent=1 // pred_fallthru
      _
    // Predicated region
    $region30: #{tpu_custom_call.1} parent=1 // pred_check
      _
    $region31: #{tpu_custom_call.1} parent=1 // pred_check_branch
      %53 = sbr.rel (0) target = $region33
    $region32: #{tpu_custom_call.1} parent=1 // pred_region
      _
    $region33: #{tpu_custom_call.1} parent=1 // pred_fallthru
      _
    // Predicated region
    $region34: #{tpu_custom_call.1} parent=1 // pred_check
      _
    $region35: #{tpu_custom_call.1} parent=1 // pred_check_branch
      %55 = sbr.rel (0) target = $region37
    $region36: #{tpu_custom_call.1} parent=1 // pred_region
      %56 = dma.done [#allocation4], 256
    $region37: #{tpu_custom_call.1} parent=1 // pred_fallthru
      _
    // Predicated region
    $region38: #{tpu_custom_call.1} parent=1 // pred_check
      _
    $region39: #{tpu_custom_call.1} parent=1 // pred_check_branch
      %58 = sbr.rel (0) target = $region41
    $region40: #{tpu_custom_call.1} parent=1 // pred_region
      %59 = dma.done [#allocation7], 256
    $region41: #{tpu_custom_call.1} parent=1 // pred_fallthru
      _
    %v61 = vld [vmem:[#allocation3] sm:$0xff]
    %v62 = vld [vmem:[#allocation3 + $0x8] sm:$0xff]
    %v63 = vmul.f32 %v61, %v61
    %v64 = vmul.f32 %v62, %v62
    %vm65 = vcmask 261120
    %v66 = vsel %vm65, %v63, 0.0
    %67 = vadd.xlane.f32.xlu0 %v66
    %v68 = vpop.xlane.xlu0 %67
    %v69 = vsel %vm65, %v64, 0.0
    %70 = vadd.xlane.f32.xlu0 %v69
    %v71 = vpop.xlane.xlu0 %70
    %v72 = vmax.f32 %v68, 1e-24
    %v73 = vmax.f32 %v71, 1e-24
    %v74 = vrsqrt.pop %v72
    %v75 = vrsqrt.pop %v73
    %v76 = vmul.f32 %v61, %v74
    %v77 = vmul.f32 %v62, %v75
    %v78 = vld [vmem:[%s1] sm:$0xff]
    %v79 = vld [vmem:[%s1 + $0x8] sm:$0xff]
    %v80 = vld [vmem:[%s1 + $0x10] sm:$0xff]
    %v81 = vld [vmem:[%s1 + $0x18] sm:$0xff]
    %v83 = vsel %vm65, %v76, 0
    %v86 = vsel %vm65, %v77, 0
    %88 = vmatprep.subr.mxu0 0.0
    %89 = vmatpush1.msra.mxu0 0.0
    %90 = vmatprep.subr.mxu0 0.0
    %91 = vmatpush1.msra.mxu0 0.0
    %92 = vmatprep.subr.mxu0 0.0
    %93 = vmatpush1.msra.mxu0 0.0
    %94 = vmatprep.subr.mxu0 0.0
    %95 = vmatpush1.msra.mxu0 0.0
    %96 = vmatprep.subr.mxu0 0.0
    %97 = vmatpush1.msra.mxu0 0.0
    %98 = vmatprep.subr.mxu0 0.0
    %99 = vmatpush1.msra.mxu0 0.0
    %100 = vmatprep.subr.mxu0 0.0
    %101 = vmatpush1.msra.mxu0 0.0
    %102 = vmatprep.subr.mxu0 0.0
    %103 = vmatpush1.msra.mxu0 0.0
    %104 = vmatprep.subr.mxu0 0.0
    %105 = vmatpush1.msra.mxu0 0.0
    %106 = vmatprep.subr.mxu0 0.0
    %107 = vmatpush1.msra.mxu0 0.0
    %108 = vmatprep.subr.mxu0 0.0
    %109 = vmatpush1.msra.mxu0 0.0
    %110 = vmatprep.subr.mxu0 0.0
    %111 = vmatpush1.msra.mxu0 0.0
    %112 = vmatprep.subr.mxu0 0.0
    %113 = vmatpush1.msra.mxu0 %v81
    %114 = vmatprep.subr.mxu0 0.0
    %115 = vmatpush1.msra.mxu0 %v80
    %116 = vmatprep.subr.mxu0 0.0
    %117 = vmatpush1.msra.mxu0 %v79
    %118 = vmatprep.subr.mxu0 0.0
    %119 = vmatpush1.msra.mxu0 %v78
    %120 = vmatprep.subr.mxu0 0.0
    %121 = vmatpush2.msra.mxu0 0.0
    %122 = vmatprep.subr.mxu0 0.0
    %123 = vmatpush2.msra.mxu0 0.0
    %124 = vmatprep.subr.mxu0 0.0
    %125 = vmatpush2.msra.mxu0 0.0
    %126 = vmatprep.subr.mxu0 0.0
    %127 = vmatpush2.msra.mxu0 0.0
    %128 = vmatprep.subr.mxu0 0.0
    %129 = vmatpush2.msra.mxu0 0.0
    %130 = vmatprep.subr.mxu0 0.0
    %131 = vmatpush2.msra.mxu0 0.0
    %132 = vmatprep.subr.mxu0 0.0
    %133 = vmatpush2.msra.mxu0 0.0
    %134 = vmatprep.subr.mxu0 0.0
    %135 = vmatpush2.msra.mxu0 0.0
    %136 = vmatprep.subr.mxu0 0.0
    %137 = vmatpush2.msra.mxu0 0.0
    %138 = vmatprep.subr.mxu0 0.0
    %139 = vmatpush2.msra.mxu0 0.0
    %140 = vmatprep.subr.mxu0 0.0
    %141 = vmatpush2.msra.mxu0 0.0
    %142 = vmatprep.subr.mxu0 0.0
    %143 = vmatpush2.msra.mxu0 0.0
    %144 = vmatprep.subr.mxu0 0.0
    %145 = vmatpush2.msra.mxu0 0.0
    %146 = vmatprep.subr.mxu0 0.0
    %147 = vmatpush2.msra.mxu0 0.0
    %148 = vmatprep.subr.mxu0 0.0
    %149 = vmatpush2.msra.mxu0 0.0
    %150 = vmatprep.subr.mxu0 0.0
    %151 = vmatpush2.msra.mxu0 0.0
    %152 = vmatprep.mubr.f32.mxu0 0.0
    %153 = vmatmul.mubr.f32.gmra.mxu0 %v83
    %v154 = vpop.f32.mrf.mxu0
    %v155 = vadd.f32 0.0, %v154
    %v156 = vpop.f32.mrf.mxu0
    %157 = vmatprep.mubr.f32.mxu0 0.0
    %158 = vmatmul.mubr.f32.gmra.mxu0 %v86
    %v159 = vpop.f32.mrf.mxu0
    %v160 = vadd.f32 0.0, %v159
    %v161 = vpop.f32.mrf.mxu0
    %162 = vdwg.mxu0
    %v163 = vsub.f32 0.0, %v155
    %v164 = vsub.f32 0.0, %v160
    %v165 = vmul.f32 %v163, 1.442695
    %v166 = vpow.pop %v165
    %v167 = vmul.f32 %v164, 1.442695
    %v168 = vpow.pop %v167
    %v169 = vadd.f32 %v166, 1.0
    %v170 = vadd.f32 %v168, 1.0
    %v171 = vrcp.pop %v169
    %v172 = vmul.f32 1.0, %v171
    %v173 = vrcp.pop %v170
    %v174 = vmul.f32 1.0, %v173
    %v175 = vld [vmem:[#allocation2] sm:$0x1]
    %v177 = vlaneseq
    %v178 = vshrl.u32 %v177, 7
    %v179 = vsub.s32 0, %v178
    %v180 = vrot.slane %v175, %v179
    %vm182 = vcmp.gt.f32.partialorder %v172, %v180
    %vm183 = vcmp.gt.f32.partialorder %v174, %v180
    %v184 = vsel %vm182, 1, 0
    %v185 = vsel %vm183, 1, 0
    %v186 = vcvt.s32.f32 %v184
    %v187 = vcvt.s32.f32 %v185
    %v188 = vadd.f32 %v186, 0.0
    %v189 = vadd.f32 %v187, 0.0
    %v190 = vlaneseq
    %v191 = vand.u32 %v190, 127
    %vm192 = vcmp.eq.f32.partialorder %v172, %v172
    %vm193 = vcmp.eq.f32.partialorder %v174, %v174
    %v194 = vsel %vm192, %v191, 1
    %v195 = vsel %vm193, %v191, 1
    %vm196 = vcmp.eq.s32.totalorder %v191, %v194
    %vm197 = vcmp.eq.s32.totalorder %v191, %v195
    %v198 = vsel %vm196, 1, 0
    %v199 = vsel %vm197, 1, 0
    %v200 = vcvt.s32.f32 %v198
    %v201 = vcvt.s32.f32 %v199
    %v202 = vadd.f32 %v188, 1e-12
    %v203 = vadd.f32 %v189, 1e-12
    %v204 = vrcp.pop %v202
    %v205 = vmul.f32 1.0, %v204
    %v206 = vrcp.pop %v203
    %v207 = vmul.f32 1.0, %v206
    %vm208 = vcmp.gt.f32.partialorder %v188, 0.0
    %vm209 = vcmp.gt.f32.partialorder %v189, 0.0
    %v210 = vmul.f32 %v186, %v205
    %v211 = vmul.f32 %v187, %v207
    %v212 = vsel %vm208, %v210, %v200
    %v213 = vsel %vm209, %v211, %v201
    %v214 = vpack.c.bf16 %v62, %v61
    %v215 = vld [vmem:[#allocation6] sm:$0xf]
    %v216 = vld [vmem:[#allocation6 + $0x4] sm:$0xf]
    %v217 = vld [vmem:[#allocation6 + $0x8] sm:$0xf]
    %v218 = vld [vmem:[#allocation6 + $0xc] sm:$0xf]
    %v219 = vld [vmem:[%s5] sm:$0x1]
    %v221 = vlaneseq
    %v222 = vshrl.u32 %v221, 7
    %v223 = vsub.s32 0, %v222
    %v224 = vrot.slane %v219, %v223
    %v230 = vunpack.c.l.b16 %v215
    %v231 = vunpack.c.l.b16 %v216
    %v232 = vunpack.c.l.b16 %v217
    %v233 = vunpack.c.l.b16 %v218
    %v234 = vpack.c.b16 %v231, %v230
    %v235 = vpack.c.b16 %v233, %v232
    %v239 = vsel %vm65, %v214, 0
    %241 = vmatprep.subr.bf16.mxu0 0
    %242 = vmatpush1.bf16.msra.mxu0 0
    %243 = vmatprep.subr.bf16.mxu0 0
    %244 = vmatpush1.bf16.msra.mxu0 0
    %245 = vmatprep.subr.bf16.mxu0 0
    %246 = vmatpush1.bf16.msra.mxu0 0
    %247 = vmatprep.subr.bf16.mxu0 0
    %248 = vmatpush1.bf16.msra.mxu0 0
    %249 = vmatprep.subr.bf16.mxu0 0
    %250 = vmatpush1.bf16.msra.mxu0 0
    %251 = vmatprep.subr.bf16.mxu0 0
    %252 = vmatpush1.bf16.msra.mxu0 0
    %253 = vmatprep.subr.bf16.mxu0 0
    %254 = vmatpush1.bf16.msra.mxu0 %v235
    %255 = vmatprep.subr.bf16.mxu0 0
    %256 = vmatpush1.bf16.msra.mxu0 %v234
    %257 = vmatprep.subr.bf16.mxu0 0
    %258 = vmatpush2.bf16.msra.mxu0 0
    %259 = vmatprep.subr.bf16.mxu0 0
    %260 = vmatpush2.bf16.msra.mxu0 0
    %261 = vmatprep.subr.bf16.mxu0 0
    %262 = vmatpush2.bf16.msra.mxu0 0
    %263 = vmatprep.subr.bf16.mxu0 0
    %264 = vmatpush2.bf16.msra.mxu0 0
    %265 = vmatprep.subr.bf16.mxu0 0
    %266 = vmatpush2.bf16.msra.mxu0 0
    %267 = vmatprep.subr.bf16.mxu0 0
    %268 = vmatpush2.bf16.msra.mxu0 0
    %269 = vmatprep.subr.bf16.mxu0 0
    %270 = vmatpush2.bf16.msra.mxu0 0
    %271 = vmatprep.subr.bf16.mxu0 0
    %272 = vmatpush2.bf16.msra.mxu0 0
    %273 = vmatprep.mubr.bf16.mxu0 0
    %274 = vmatmul.mubr.bf16.gmra.mxu0 %v239
    %v275 = vpop.f32.mrf.mxu0
    %v276 = vadd.f32 %v224, %v275
    %v277 = vpop.f32.mrf.mxu0
    %v278 = vpop.f32.mrf.mxu0
    %v279 = vadd.f32 %v224, %v278
    %v280 = vpop.f32.mrf.mxu0
    %281 = vdwg.mxu0
    %v282 = vmul.f32 %v276, %v276
    %v283 = vmul.f32 %v279, %v279
    %v284 = vmul.f32 %v282, %v276
    %v285 = vmul.f32 %v283, %v279
    %v286 = vmul.f32 %v284, 0.044715
    %v287 = vmul.f32 %v285, 0.044715
    %v288 = vadd.f32 %v276, %v286
    %v289 = vadd.f32 %v279, %v287
    %v290 = vmul.f32 %v288, 0.7978846
    %v291 = vmul.f32 %v289, 0.7978846
    %v292 = vmul.f32 %v276, 0.5
    %v293 = vmul.f32 %v279, 0.5
    %v294 = vtanh.pop %v290
    %v295 = vtanh.pop %v291
    %v296 = vadd.f32 %v294, 1.0
    %v297 = vadd.f32 %v295, 1.0
    %v298 = vmul.f32 %v292, %v296
    %v299 = vmul.f32 %v293, %v297
    %301 = vset.pattern.permute.xlu0 0
    %302 = vperm.xlu0 %301, %v212
    %v303 = vpop.permute.xlu0 %302
    %306 = vset.pattern.permute.xlu0 0
    %307 = vperm.xlu0 %306, %v213
    %v308 = vpop.permute.xlu0 %307
    %v310 = vmul.f32 %v298, %v303
    %v311 = vmul.f32 %v299, %v308
    %v312 = vpack.c.bf16 %v311, %v310
    %v313 = vld [vmem:[%s7] sm:$0x1]
    %v314 = vunpack.c.l.bf16 %v313
    %v315 = vlaneseq
    %v316 = vshrl.u32 %v315, 7
    %v317 = vsub.s32 0, %v316
    %v318 = vrot.slane %v314, %v317
    %v319 = vmul.f32 %v303, %v318
    %v320 = vmul.f32 %v308, %v318
    %v321 = vld [vmem:[%s6] sm:$0xf]
    %v322 = vld [vmem:[%s6 + $0x4] sm:$0xf]
    %v323 = vld [vmem:[%s6 + $0x8] sm:$0xf]
    %v324 = vld [vmem:[%s6 + $0xc] sm:$0xf]
    %v325 = vld [vmem:[%s6 + $0x10] sm:$0xf]
    %v326 = vld [vmem:[%s6 + $0x14] sm:$0xf]
    %v327 = vld [vmem:[%s6 + $0x18] sm:$0xf]
    %v328 = vld [vmem:[%s6 + $0x1c] sm:$0xf]
    %v337 = vunpack.c.l.b16 %v321
    %v338 = vunpack.c.l.b16 %v322
    %v339 = vunpack.c.l.b16 %v323
    %v340 = vunpack.c.l.b16 %v324
    %v341 = vunpack.c.l.b16 %v325
    %v342 = vunpack.c.l.b16 %v326
    %v343 = vunpack.c.l.b16 %v327
    %v344 = vunpack.c.l.b16 %v328
    %v345 = vpack.c.b16 %v338, %v337
    %v346 = vpack.c.b16 %v340, %v339
    %v347 = vpack.c.b16 %v342, %v341
    %v348 = vpack.c.b16 %v344, %v343
    %vm353 = vcmask 523264
    %v355 = vsel %vm353, %v312, 0
    %357 = vmatprep.subr.bf16.mxu0 0
    %358 = vmatpush1.bf16.msra.mxu0 0
    %359 = vmatprep.subr.bf16.mxu0 0
    %360 = vmatpush1.bf16.msra.mxu0 0
    %361 = vmatprep.subr.bf16.mxu0 0
    %362 = vmatpush1.bf16.msra.mxu0 0
    %363 = vmatprep.subr.bf16.mxu0 0
    %364 = vmatpush1.bf16.msra.mxu0 0
    %365 = vmatprep.subr.bf16.mxu0 0
    %366 = vmatpush1.bf16.msra.mxu0 %v348
    %367 = vmatprep.subr.bf16.mxu0 0
    %368 = vmatpush1.bf16.msra.mxu0 %v347
    %369 = vmatprep.subr.bf16.mxu0 0
    %370 = vmatpush1.bf16.msra.mxu0 %v346
    %371 = vmatprep.subr.bf16.mxu0 0
    %372 = vmatpush1.bf16.msra.mxu0 %v345
    %373 = vmatprep.subr.bf16.mxu0 0
    %374 = vmatpush2.bf16.msra.mxu0 0
    %375 = vmatprep.subr.bf16.mxu0 0
    %376 = vmatpush2.bf16.msra.mxu0 0
    %377 = vmatprep.subr.bf16.mxu0 0
    %378 = vmatpush2.bf16.msra.mxu0 0
    %379 = vmatprep.subr.bf16.mxu0 0
    %380 = vmatpush2.bf16.msra.mxu0 0
    %381 = vmatprep.subr.bf16.mxu0 0
    %382 = vmatpush2.bf16.msra.mxu0 0
    %383 = vmatprep.subr.bf16.mxu0 0
    %384 = vmatpush2.bf16.msra.mxu0 0
    %385 = vmatprep.subr.bf16.mxu0 0
    %386 = vmatpush2.bf16.msra.mxu0 0
    %387 = vmatprep.subr.bf16.mxu0 0
    %388 = vmatpush2.bf16.msra.mxu0 0
    %389 = vmatprep.mubr.bf16.mxu0 0
    %390 = vmatmul.mubr.bf16.gmra.mxu0 %v355
    %v391 = vpop.f32.mrf.mxu0
    %v392 = vadd.f32 %v319, %v391
    %v393 = vpop.f32.mrf.mxu0
    %v394 = vpop.f32.mrf.mxu0
    %v395 = vadd.f32 %v320, %v394
    %v396 = vpop.f32.mrf.mxu0
    %397 = vdwg.mxu0
    %398 = vst [vmem:[#allocation8] sm:$0xff] %v392
    %399 = vst [vmem:[#allocation8 + $0x8] sm:$0xff] %v395
    // Predicated region
    $region42: #{tpu_custom_call.1} parent=1 // pred_check
      _
    $region43: #{tpu_custom_call.1} parent=1 // pred_check_branch
      %401 = sbr.rel (0) target = $region45
    $region44: #{tpu_custom_call.1} parent=1 // pred_region
      %s403 = ssub.s32 256, 256
      %404 = vsyncadd [#allocation5], %s403
      %s405 = sshll.u32 [#allocation8], 4
      %s406 = int_to_ptr.vmem [resolvable:$true] %s405
      %411 = dma.vmem_to_hbm [thread:$0]  %s406, 256, %s8, [#allocation5], 128, 128, 8
    $region45: #{tpu_custom_call.1} parent=1 // pred_fallthru
      _
    // Predicated region
    $region46: #{tpu_custom_call.1} parent=1 // pred_check
      _
    $region47: #{tpu_custom_call.1} parent=1 // pred_check_branch
      %413 = sbr.rel (0) target = $region49
    $region48: #{tpu_custom_call.1} parent=1 // pred_region
      %414 = dma.done [#allocation5], 256
    $region49: #{tpu_custom_call.1} parent=1 // pred_fallthru
      _
    %415 = vsyncpa [#allocation4], 1
    %416 = vsyncpa [#allocation7], 1
    %417 = vsyncpa [#allocation5], 1

</llo_original>
